<compile_context>
chip_gen: v5e
topology: v5e:2x2
jax: 0.10.0
libtpu: 0.0.40
codegen_flags: <defaults>
</compile_context>

<pallas_src>
import functools

import jax
import jax.numpy as jnp
from jax.experimental import pallas as pl
from jax.experimental.pallas import tpu as pltpu

H_HIDDEN = 10
C_IN = 2
C_OUT = 4
SUBLANE = 8

# Weight-slab row offsets: each block starts on an 8-row (sublane-tile)
# boundary so every in-kernel slice begins at a tile start.
ROW_WIH1 = 0    # (C_IN, H)  rnn1 W_ih^T
ROW_WHH1 = 8    # (H, H)     rnn1 W_hh^T
ROW_B1   = 24   # (1, H)     rnn1 b_ih + b_hh
ROW_WIH2 = 32   # (H, H)     rnn2 W_ih^T
ROW_WHH2 = 48   # (H, H)     rnn2 W_hh^T
ROW_B2   = 64   # (1, H)     rnn2 b_ih + b_hh
ROW_WFC  = 72   # (H, H)     fc W^T, only first C_OUT lanes meaningful
ROW_BFC  = 88   # (1, H)     fc b,   only first C_OUT lanes meaningful
SLAB_ROWS = 96


def _model_kernel(B, T, B_pad, x_ref, w_ref, out_ref, pre2_ref):
    """Whole model in one kernel.

    x_ref:    (T*B_pad, C_IN)  time-major, batch padded to B_pad (row = t*B_pad + b)
    w_ref:    (SLAB_ROWS, H)   packed, pre-transposed weights + combined biases
    out_ref:  (B, C_OUT)
    pre2_ref: (T*B_pad, H)     VMEM scratch holding the hoisted rnn2 input projection
    """
    f32 = jnp.float32
    H = H_HIDDEN

    # --- unpack the weight slab (static, tile-aligned slices) ----------------
    wih1t = w_ref[ROW_WIH1:ROW_WIH1 + C_IN, :]     # (C_IN, H)
    whh1t = w_ref[ROW_WHH1:ROW_WHH1 + H, :]        # (H, H)
    b1    = w_ref[ROW_B1:ROW_B1 + 1, :]            # (1, H)
    wih2t = w_ref[ROW_WIH2:ROW_WIH2 + H, :]        # (H, H)
    whh2t = w_ref[ROW_WHH2:ROW_WHH2 + H, :]        # (H, H)
    b2    = w_ref[ROW_B2:ROW_B2 + 1, :]            # (1, H)
    wfct  = w_ref[ROW_WFC:ROW_WFC + H, :]          # (H, H) (lanes >= C_OUT are zero)
    bfc   = w_ref[ROW_BFC:ROW_BFC + 1, :]          # (1, H)

    # --- RNN1: hoisted input projection (one batched matmul, off the chain) --
    pre1 = jnp.dot(x_ref[...], wih1t, preferred_element_type=f32) + b1   # (T*B_pad, H)

    h = jnp.zeros((B_pad, H), f32)
    hs = []
    for t in range(T):                         # static & small -> fully unrolled
        # pre1[t*B_pad:(t+1)*B_pad] is an exact sublane-tile view (B_pad = 8).
        h = jnp.tanh(pre1[t * B_pad:(t + 1) * B_pad, :]
                     + jnp.dot(h, whh1t, preferred_element_type=f32))
        hs.append(h)                           # (B_pad, H), stays in vregs
    y1_tm = jnp.concatenate(hs, axis=0)        # (T*B_pad, H) time-major, tile-aligned

    # --- RNN2 (batch_first=False): its "sequence" axis is the original B -----
    # Hoisted rnn2 input projection for ALL rows (one matmul), parked once in
    # VMEM scratch; the per-step (T, H) block is then a single strided sublane
    # load — no single-row slice/concat repack.
    pre2_ref[...] = jnp.dot(y1_tm, wih2t, preferred_element_type=f32) + b2

    h2 = jnp.zeros((T, H), f32)                # rnn2's "batch" size is T
    feats = []
    for s in range(B):                         # only the real batch rows are needed
        pre2_s = pre2_ref[pl.ds(s, T, stride=B_pad), :]      # rows t*B_pad + s
        h2 = jnp.tanh(pre2_s + jnp.dot(h2, whh2t, preferred_element_type=f32))
        feats.append(h2[T - 1:T, :])           # == x[:, -1, :] selection
    feat = jnp.concatenate(feats, axis=0)      # (B, H), in vregs

    # --- dropout + fc ---------------------------------------------------------
    # TODO(synk): nn.Dropout(0.2) is identity in eval mode; training-mode stochastic dropout not implemented.
    y = jnp.dot(feat, wfct, preferred_element_type=f32) + bfc    # (B, H)
    out_ref[...] = y[:, :C_OUT].astype(out_ref.dtype)


def _pack_weight_slab(p):
    """Pack all weights/biases into a single (SLAB_ROWS, H) f32 slab (one DMA)."""
    H, O = H_HIDDEN, C_OUT
    slab = jnp.zeros((SLAB_ROWS, H), jnp.float32)
    slab = slab.at[ROW_WIH1:ROW_WIH1 + C_IN, :].set(p["w_ih1_t"])
    slab = slab.at[ROW_WHH1:ROW_WHH1 + H, :].set(p["w_hh1_t"])
    slab = slab.at[ROW_B1, :].set(p["b1"][0])
    slab = slab.at[ROW_WIH2:ROW_WIH2 + H, :].set(p["w_ih2_t"])
    slab = slab.at[ROW_WHH2:ROW_WHH2 + H, :].set(p["w_hh2_t"])
    slab = slab.at[ROW_B2, :].set(p["b2"][0])
    slab = slab.at[ROW_WFC:ROW_WFC + H, :O].set(p["w_fc_t"])
    slab = slab.at[ROW_BFC, :O].set(p["b_fc"][0])
    return slab


def pytorch_model_forward(x, params):
    B, T, C = x.shape
    B_pad = max(SUBLANE, ((B + SUBLANE - 1) // SUBLANE) * SUBLANE)
    # Present x as one time-major 2-D slab with the batch axis zero-padded to a
    # sublane multiple (row = t*B_pad + b); host-side pad/transpose is cheap
    # and lets the kernel read x exactly once with tile-aligned per-step views.
    x_tm = jnp.transpose(x, (1, 0, 2))                          # (T, B, C)
    x_tm = jnp.pad(x_tm, ((0, 0), (0, B_pad - B), (0, 0)))      # (T, B_pad, C)
    x_slab = x_tm.reshape(T * B_pad, C)

    vmem = pl.BlockSpec(memory_space=pltpu.MemorySpace.VMEM)
    kernel = functools.partial(_model_kernel, B, T, B_pad)
    return pl.pallas_call(
        kernel,
        out_shape=jax.ShapeDtypeStruct((B, C_OUT), jnp.float32),
        in_specs=[vmem, vmem],
        out_specs=vmem,
        scratch_shapes=[pltpu.VMEM((T * B_pad, H_HIDDEN), jnp.float32)],
    )(x_slab, params["w_slab"])


def init_params(key):
    """Deterministic init matching PyTorch shapes (uniform +-1/sqrt(hidden)).

    Weights are stored pre-transposed and also packed into a single slab.
    """
    H, IN, O = H_HIDDEN, C_IN, C_OUT
    ks = jax.random.split(key, 10)
    bound = 1.0 / jnp.sqrt(jnp.float32(H))
    u = lambda k, s: jax.random.uniform(k, s, jnp.float32, -bound, bound)
    w_ih1 = u(ks[0], (H, IN)); w_hh1 = u(ks[1], (H, H))
    b_ih1 = u(ks[2], (H,));    b_hh1 = u(ks[3], (H,))
    w_ih2 = u(ks[4], (H, H));  w_hh2 = u(ks[5], (H, H))
    b_ih2 = u(ks[6], (H,));    b_hh2 = u(ks[7], (H,))
    w_fc = u(ks[8], (O, H));   b_fc = u(ks[9], (O,))
    p = dict(
        w_ih1_t=w_ih1.T, w_hh1_t=w_hh1.T, b1=(b_ih1 + b_hh1)[None, :],
        w_ih2_t=w_ih2.T, w_hh2_t=w_hh2.T, b2=(b_ih2 + b_hh2)[None, :],
        w_fc_t=w_fc.T, b_fc=b_fc[None, :],
    )
    p["w_slab"] = _pack_weight_slab(p)
    return p


def reference_forward(x, p):
    """Pure-JAX mirror of the PyTorch forward (eval mode) for validation."""
    B, T, _ = x.shape
    H = p["w_hh1_t"].shape[0]
    h = jnp.zeros((B, H), jnp.float32)
    ys = []
    for t in range(T):
        h = jnp.tanh(x[:, t, :] @ p["w_ih1_t"] + h @ p["w_hh1_t"] + p["b1"])
        ys.append(h)
    y1 = jnp.stack(ys, axis=1)                      # (B, T, H)
    h2 = jnp.zeros((T, H), jnp.float32)
    feats = []
    for s in range(B):                              # rnn2 seq axis = B
        h2 = jnp.tanh(y1[s] @ p["w_ih2_t"] + h2 @ p["w_hh2_t"] + p["b2"])
        feats.append(h2[T - 1])
    feat = jnp.stack(feats, axis=0)                 # (B, H)
    return feat @ p["w_fc_t"] + p["b_fc"]


if __name__ == "__main__":
    key = jax.random.PRNGKey(0)
    k_params, k_x = jax.random.split(key)
    params = init_params(k_params)

    B, T = 2, 8                                     # small batch, seq_len
    x = jax.random.normal(k_x, (B, T, C_IN), jnp.float32)

    out = jax.block_until_ready(pytorch_model_forward(x, params))
    ref = jax.block_until_ready(reference_forward(x, params))

    assert out.shape == (B, C_OUT), out.shape
    assert jnp.allclose(out, ref, atol=1e-5, rtol=1e-5), (out, ref)
    print("KERNEL_OK")
</pallas_src>

<mosaic_0001>
module attributes {stable_mosaic.version = 11 : i64} {
  func.func @_model_kernel(%arg0: memref<64x2xf32, #tpu.memory_space<vmem>>, %arg1: memref<96x10xf32, #tpu.memory_space<vmem>>, %arg2: memref<2x4xf32, #tpu.memory_space<vmem>>, %arg3: memref<64x10xf32, #tpu.memory_space<vmem>>) attributes {dimension_semantics = [], scalar_prefetch = 0 : i64, scratch_operands = 1 : i64, tpu.core_type = #tpu.core_type<tc>} {
    %c0 = arith.constant 0 : index
    %c0_0 = arith.constant 0 : index
    %0 = vector.load %arg1[%c0, %c0_0] : memref<96x10xf32, #tpu.memory_space<vmem>>, vector<2x10xf32>
    %c8 = arith.constant 8 : index
    %c0_1 = arith.constant 0 : index
    %1 = vector.load %arg1[%c8, %c0_1] : memref<96x10xf32, #tpu.memory_space<vmem>>, vector<10x10xf32>
    %c24 = arith.constant 24 : index
    %c0_2 = arith.constant 0 : index
    %2 = vector.load %arg1[%c24, %c0_2] : memref<96x10xf32, #tpu.memory_space<vmem>>, vector<1x10xf32>
    %c32 = arith.constant 32 : index
    %c0_3 = arith.constant 0 : index
    %3 = vector.load %arg1[%c32, %c0_3] : memref<96x10xf32, #tpu.memory_space<vmem>>, vector<10x10xf32>
    %c48 = arith.constant 48 : index
    %c0_4 = arith.constant 0 : index
    %4 = vector.load %arg1[%c48, %c0_4] : memref<96x10xf32, #tpu.memory_space<vmem>>, vector<10x10xf32>
    %c64 = arith.constant 64 : index
    %c0_5 = arith.constant 0 : index
    %5 = vector.load %arg1[%c64, %c0_5] : memref<96x10xf32, #tpu.memory_space<vmem>>, vector<1x10xf32>
    %c72 = arith.constant 72 : index
    %c0_6 = arith.constant 0 : index
    %6 = vector.load %arg1[%c72, %c0_6] : memref<96x10xf32, #tpu.memory_space<vmem>>, vector<10x10xf32>
    %c88 = arith.constant 88 : index
    %c0_7 = arith.constant 0 : index
    %7 = vector.load %arg1[%c88, %c0_7] : memref<96x10xf32, #tpu.memory_space<vmem>>, vector<1x10xf32>
    %c0_8 = arith.constant 0 : index
    %c0_9 = arith.constant 0 : index
    %8 = vector.load %arg0[%c0_8, %c0_9] : memref<64x2xf32, #tpu.memory_space<vmem>>, vector<64x2xf32>
    %cst = arith.constant dense<0.000000e+00> : vector<64x10xf32>
    %9 = tpu.matmul %8, %0, %cst {dimension_numbers = #tpu.dot_dimension_numbers<[1], [0], [0], [1], [0, 0, 1, 1], [], []>} : vector<64x2xf32>, vector<2x10xf32>, vector<64x10xf32> -> vector<64x10xf32>
    %10 = vector.broadcast %2 : vector<1x10xf32> to vector<64x10xf32>
    %11 = arith.addf %9, %10 : vector<64x10xf32>
    %cst_10 = arith.constant 0.000000e+00 : f32
    %12 = vector.broadcast %cst_10 : f32 to vector<8x10xf32>
    %13 = vector.extract_strided_slice %11 {offsets = [0, 0], sizes = [8, 10], strides = [1, 1]} : vector<64x10xf32> to vector<8x10xf32>
    %cst_11 = arith.constant dense<0.000000e+00> : vector<8x10xf32>
    %14 = tpu.matmul %12, %1, %cst_11 {dimension_numbers = #tpu.dot_dimension_numbers<[1], [0], [0], [1], [0, 0, 1, 1], [], []>} : vector<8x10xf32>, vector<10x10xf32>, vector<8x10xf32> -> vector<8x10xf32>
    %15 = arith.addf %13, %14 : vector<8x10xf32>
    %16 = math.tanh %15 : vector<8x10xf32>
    %17 = vector.extract_strided_slice %11 {offsets = [8, 0], sizes = [8, 10], strides = [1, 1]} : vector<64x10xf32> to vector<8x10xf32>
    %cst_12 = arith.constant dense<0.000000e+00> : vector<8x10xf32>
    %18 = tpu.matmul %16, %1, %cst_12 {dimension_numbers = #tpu.dot_dimension_numbers<[1], [0], [0], [1], [0, 0, 1, 1], [], []>} : vector<8x10xf32>, vector<10x10xf32>, vector<8x10xf32> -> vector<8x10xf32>
    %19 = arith.addf %17, %18 : vector<8x10xf32>
    %20 = math.tanh %19 : vector<8x10xf32>
    %21 = vector.extract_strided_slice %11 {offsets = [16, 0], sizes = [8, 10], strides = [1, 1]} : vector<64x10xf32> to vector<8x10xf32>
    %cst_13 = arith.constant dense<0.000000e+00> : vector<8x10xf32>
    %22 = tpu.matmul %20, %1, %cst_13 {dimension_numbers = #tpu.dot_dimension_numbers<[1], [0], [0], [1], [0, 0, 1, 1], [], []>} : vector<8x10xf32>, vector<10x10xf32>, vector<8x10xf32> -> vector<8x10xf32>
    %23 = arith.addf %21, %22 : vector<8x10xf32>
    %24 = math.tanh %23 : vector<8x10xf32>
    %25 = vector.extract_strided_slice %11 {offsets = [24, 0], sizes = [8, 10], strides = [1, 1]} : vector<64x10xf32> to vector<8x10xf32>
    %cst_14 = arith.constant dense<0.000000e+00> : vector<8x10xf32>
    %26 = tpu.matmul %24, %1, %cst_14 {dimension_numbers = #tpu.dot_dimension_numbers<[1], [0], [0], [1], [0, 0, 1, 1], [], []>} : vector<8x10xf32>, vector<10x10xf32>, vector<8x10xf32> -> vector<8x10xf32>
    %27 = arith.addf %25, %26 : vector<8x10xf32>
    %28 = math.tanh %27 : vector<8x10xf32>
    %29 = vector.extract_strided_slice %11 {offsets = [32, 0], sizes = [8, 10], strides = [1, 1]} : vector<64x10xf32> to vector<8x10xf32>
    %cst_15 = arith.constant dense<0.000000e+00> : vector<8x10xf32>
    %30 = tpu.matmul %28, %1, %cst_15 {dimension_numbers = #tpu.dot_dimension_numbers<[1], [0], [0], [1], [0, 0, 1, 1], [], []>} : vector<8x10xf32>, vector<10x10xf32>, vector<8x10xf32> -> vector<8x10xf32>
    %31 = arith.addf %29, %30 : vector<8x10xf32>
    %32 = math.tanh %31 : vector<8x10xf32>
    %33 = vector.extract_strided_slice %11 {offsets = [40, 0], sizes = [8, 10], strides = [1, 1]} : vector<64x10xf32> to vector<8x10xf32>
    %cst_16 = arith.constant dense<0.000000e+00> : vector<8x10xf32>
    %34 = tpu.matmul %32, %1, %cst_16 {dimension_numbers = #tpu.dot_dimension_numbers<[1], [0], [0], [1], [0, 0, 1, 1], [], []>} : vector<8x10xf32>, vector<10x10xf32>, vector<8x10xf32> -> vector<8x10xf32>
    %35 = arith.addf %33, %34 : vector<8x10xf32>
    %36 = math.tanh %35 : vector<8x10xf32>
    %37 = vector.extract_strided_slice %11 {offsets = [48, 0], sizes = [8, 10], strides = [1, 1]} : vector<64x10xf32> to vector<8x10xf32>
    %cst_17 = arith.constant dense<0.000000e+00> : vector<8x10xf32>
    %38 = tpu.matmul %36, %1, %cst_17 {dimension_numbers = #tpu.dot_dimension_numbers<[1], [0], [0], [1], [0, 0, 1, 1], [], []>} : vector<8x10xf32>, vector<10x10xf32>, vector<8x10xf32> -> vector<8x10xf32>
    %39 = arith.addf %37, %38 : vector<8x10xf32>
    %40 = math.tanh %39 : vector<8x10xf32>
    %41 = vector.extract_strided_slice %11 {offsets = [56, 0], sizes = [8, 10], strides = [1, 1]} : vector<64x10xf32> to vector<8x10xf32>
    %cst_18 = arith.constant dense<0.000000e+00> : vector<8x10xf32>
    %42 = tpu.matmul %40, %1, %cst_18 {dimension_numbers = #tpu.dot_dimension_numbers<[1], [0], [0], [1], [0, 0, 1, 1], [], []>} : vector<8x10xf32>, vector<10x10xf32>, vector<8x10xf32> -> vector<8x10xf32>
    %43 = arith.addf %41, %42 : vector<8x10xf32>
    %44 = math.tanh %43 : vector<8x10xf32>
    %45 = tpu.concatenate %16, %20, %24, %28, %32, %36, %40, %44 in 0 : vector<8x10xf32>, vector<8x10xf32>, vector<8x10xf32>, vector<8x10xf32>, vector<8x10xf32>, vector<8x10xf32>, vector<8x10xf32>, vector<8x10xf32> -> vector<64x10xf32>
    %cst_19 = arith.constant dense<0.000000e+00> : vector<64x10xf32>
    %46 = tpu.matmul %45, %3, %cst_19 {dimension_numbers = #tpu.dot_dimension_numbers<[1], [0], [0], [1], [0, 0, 1, 1], [], []>} : vector<64x10xf32>, vector<10x10xf32>, vector<64x10xf32> -> vector<64x10xf32>
    %47 = vector.broadcast %5 : vector<1x10xf32> to vector<64x10xf32>
    %48 = arith.addf %46, %47 : vector<64x10xf32>
    %c0_20 = arith.constant 0 : index
    %c0_21 = arith.constant 0 : index
    %49 = vector.load %arg3[%c0_20, %c0_21] : memref<64x10xf32, #tpu.memory_space<vmem>>, vector<64x10xf32>
    tpu.vector_store %arg3[%c0_20, %c0_21], %48 {strides = array<i32>} : memref<64x10xf32, #tpu.memory_space<vmem>>, vector<64x10xf32>,
    %cst_22 = arith.constant 0.000000e+00 : f32
    %50 = vector.broadcast %cst_22 : f32 to vector<8x10xf32>
    %c0_23 = arith.constant 0 : index
    %c0_24 = arith.constant 0 : index
    %51 = tpu.strided_load %arg3[%c0_23, %c0_24] {strides = array<i32: 8, 1>} : memref<64x10xf32, #tpu.memory_space<vmem>>, vector<8x10xf32>
    %cst_25 = arith.constant dense<0.000000e+00> : vector<8x10xf32>
    %52 = tpu.matmul %50, %4, %cst_25 {dimension_numbers = #tpu.dot_dimension_numbers<[1], [0], [0], [1], [0, 0, 1, 1], [], []>} : vector<8x10xf32>, vector<10x10xf32>, vector<8x10xf32> -> vector<8x10xf32>
    %53 = arith.addf %51, %52 : vector<8x10xf32>
    %54 = math.tanh %53 : vector<8x10xf32>
    %55 = vector.extract_strided_slice %54 {offsets = [7, 0], sizes = [1, 10], strides = [1, 1]} : vector<8x10xf32> to vector<1x10xf32>
    %c1 = arith.constant 1 : index
    %c0_26 = arith.constant 0 : index
    %56 = tpu.strided_load %arg3[%c1, %c0_26] {strides = array<i32: 8, 1>} : memref<64x10xf32, #tpu.memory_space<vmem>>, vector<8x10xf32>
    %cst_27 = arith.constant dense<0.000000e+00> : vector<8x10xf32>
    %57 = tpu.matmul %54, %4, %cst_27 {dimension_numbers = #tpu.dot_dimension_numbers<[1], [0], [0], [1], [0, 0, 1, 1], [], []>} : vector<8x10xf32>, vector<10x10xf32>, vector<8x10xf32> -> vector<8x10xf32>
    %58 = arith.addf %56, %57 : vector<8x10xf32>
    %59 = math.tanh %58 : vector<8x10xf32>
    %60 = vector.extract_strided_slice %59 {offsets = [7, 0], sizes = [1, 10], strides = [1, 1]} : vector<8x10xf32> to vector<1x10xf32>
    %61 = tpu.concatenate %55, %60 in 0 : vector<1x10xf32>, vector<1x10xf32> -> vector<2x10xf32>
    %cst_28 = arith.constant dense<0.000000e+00> : vector<2x10xf32>
    %62 = tpu.matmul %61, %6, %cst_28 {dimension_numbers = #tpu.dot_dimension_numbers<[1], [0], [0], [1], [0, 0, 1, 1], [], []>} : vector<2x10xf32>, vector<10x10xf32>, vector<2x10xf32> -> vector<2x10xf32>
    %63 = vector.broadcast %7 : vector<1x10xf32> to vector<2x10xf32>
    %64 = arith.addf %62, %63 : vector<2x10xf32>
    %65 = vector.extract_strided_slice %64 {offsets = [0, 0], sizes = [2, 4], strides = [1, 1]} : vector<2x10xf32> to vector<2x4xf32>
    %c0_29 = arith.constant 0 : index
    %c0_30 = arith.constant 0 : index
    %66 = vector.load %arg2[%c0_29, %c0_30] : memref<2x4xf32, #tpu.memory_space<vmem>>, vector<2x4xf32>
    tpu.vector_store %arg2[%c0_29, %c0_30], %65 {strides = array<i32>} : memref<2x4xf32, #tpu.memory_space<vmem>>, vector<2x4xf32>,
    return
  }
}

</mosaic_0001>

<llo_original>
// kernel: tpu_custom_call.1
$region0: #{tpu_custom_call.1}
  #allocation0 [shape = 'u32[]', space=smem, size = 0x4, offset = 0x4, fixed_abs, tag = 'smem constant byte address 0x4 - core index']
  #allocation1 [shape = 'u32[72,128]{1,0:T(1,128)}', space=vmem, size = 0x9000, scoped, tag = 'internal scratch']
  #allocation2 [shape = 'f32[64,10]{1,0:T(8,128)}', space=vmem, size = 0x8000, scoped, tag = 'scratch operand']
  %s0 = inlined_call_operand.vmem [shape: f32[64,2], index: 0, kind: input, shape index: {}]
  %s1 = inlined_call_operand.vmem [shape: f32[96,10], index: 1, kind: input, shape index: {}]
  %s2 = inlined_call_operand.hbm [shape: f32[2,4], index: 2, kind: output, shape index: {}]
  %s3 = sld [smem:[#allocation0]]
  $region18: #{tpu_custom_call.1} parent=0
    _
  %s5 = ssub.s32 1, %s3
  %s6 = scalar_select 0, %s5, %s3
  $region1: #{tpu_custom_call.1} parent=0
    #allocation3 [shape = 'u8[1024]{0}', space=vmem, size = 0x400, scoped, tag = 'output window, operand 0, single buffered']
    #allocation4 [shape = 's32[1]{0}', space=sflag, size = 0x4, scoped, tag = 'scoped memory for tpu_custom_call.1']
    %7 = vsyncpa [#allocation4], 0
    // Predicated region
    $region2: #{tpu_custom_call.1} parent=1 // pred_check
      _
    $region3: #{tpu_custom_call.1} parent=1 // pred_check_branch
      %9 = sbr.rel (0) target = $region5
    $region4: #{tpu_custom_call.1} parent=1 // pred_region
      _
    $region5: #{tpu_custom_call.1} parent=1 // pred_fallthru
      _
    // Predicated region
    $region6: #{tpu_custom_call.1} parent=1 // pred_check
      _
    $region7: #{tpu_custom_call.1} parent=1 // pred_check_branch
      %11 = sbr.rel (0) target = $region9
    $region8: #{tpu_custom_call.1} parent=1 // pred_region
      _
    $region9: #{tpu_custom_call.1} parent=1 // pred_fallthru
      _
    %v12 = vld [vmem:[%s1] sm:$0x3]
    %v13 = vld [vmem:[%s1 + $0x8] sm:$0xff]
    %v14 = vld [vmem:[%s1 + $0x10] sm:$0x3]
    %v15 = vld [vmem:[%s1 + $0x18] sm:$0x1]
    %v16 = vld [vmem:[%s1 + $0x20] sm:$0xff]
    %v17 = vld [vmem:[%s1 + $0x28] sm:$0x3]
    %v18 = vld [vmem:[%s1 + $0x30] sm:$0xff]
    %v19 = vld [vmem:[%s1 + $0x38] sm:$0x3]
    %v20 = vld [vmem:[%s1 + $0x40] sm:$0x1]
    %v21 = vld [vmem:[%s1 + $0x48] sm:$0xff]
    %v22 = vld [vmem:[%s1 + $0x50] sm:$0x3]
    %v23 = vld [vmem:[%s1 + $0x58] sm:$0x1]
    %v24 = vld [vmem:[%s0] sm:$0xff]
    %v25 = vld [vmem:[%s0 + $0x8] sm:$0xff]
    %v26 = vld [vmem:[%s0 + $0x10] sm:$0xff]
    %v27 = vld [vmem:[%s0 + $0x18] sm:$0xff]
    %v28 = vld [vmem:[%s0 + $0x20] sm:$0xff]
    %v29 = vld [vmem:[%s0 + $0x28] sm:$0xff]
    %v30 = vld [vmem:[%s0 + $0x30] sm:$0xff]
    %v31 = vld [vmem:[%s0 + $0x38] sm:$0xff]
    %v32 = vperm.slane %v15, 0
    %vm33 = vcmask 15360
    %v35 = vsel %vm33, %v24, 0
    %v38 = vsel %vm33, %v25, 0
    %v41 = vsel %vm33, %v26, 0
    %v44 = vsel %vm33, %v27, 0
    %v47 = vsel %vm33, %v28, 0
    %v50 = vsel %vm33, %v29, 0
    %v53 = vsel %vm33, %v30, 0
    %v56 = vsel %vm33, %v31, 0
    %vm58 = vcmask 1041408
    %v60 = vsel %vm58, %v12, 0
    %62 = vmatpush.msra.mxu0 0.0
    %63 = vmatpush.msra.mxu0 0.0
    %64 = vmatpush.msra.mxu0 0.0
    %65 = vmatpush.msra.mxu0 0.0
    %66 = vmatpush.msra.mxu0 0.0
    %67 = vmatpush.msra.mxu0 0.0
    %68 = vmatpush.msra.mxu0 0.0
    %69 = vmatpush.msra.mxu0 0.0
    %70 = vmatpush.msra.mxu0 0.0
    %71 = vmatpush.msra.mxu0 0.0
    %72 = vmatpush.msra.mxu0 0.0
    %73 = vmatpush.msra.mxu0 0.0
    %74 = vmatpush.msra.mxu0 0.0
    %75 = vmatpush.msra.mxu0 0.0
    %76 = vmatpush.msra.mxu0 0.0
    %77 = vmatpush.msra.mxu0 %v60
    %78 = vmatmul.f32.gmra.mxu0 %v35
    %v79 = vpop.f32.mrf.mxu0
    %v80 = vadd.f32 %v32, %v79
    %81 = vmatmul.f32.gmra.mxu0 %v38
    %v82 = vpop.f32.mrf.mxu0
    %v83 = vadd.f32 %v32, %v82
    %84 = vmatmul.f32.gmra.mxu0 %v41
    %v85 = vpop.f32.mrf.mxu0
    %v86 = vadd.f32 %v32, %v85
    %87 = vmatmul.f32.gmra.mxu0 %v44
    %v88 = vpop.f32.mrf.mxu0
    %v89 = vadd.f32 %v32, %v88
    %90 = vmatmul.f32.gmra.mxu0 %v47
    %v91 = vpop.f32.mrf.mxu0
    %v92 = vadd.f32 %v32, %v91
    %93 = vmatmul.f32.gmra.mxu0 %v50
    %v94 = vpop.f32.mrf.mxu0
    %v95 = vadd.f32 %v32, %v94
    %96 = vmatmul.f32.gmra.mxu0 %v53
    %v97 = vpop.f32.mrf.mxu0
    %v98 = vadd.f32 %v32, %v97
    %99 = vmatmul.f32.gmra.mxu0 %v56
    %v100 = vpop.f32.mrf.mxu0
    %v101 = vadd.f32 %v32, %v100
    %102 = vdwg.mxu0
    %vm103 = vcmask 80896
    %v105 = vsel %vm103, 0.0, 0
    %v108 = vsel %vm58, %v14, 0
    %110 = vmatpush.msra.mxu0 0.0
    %111 = vmatpush.msra.mxu0 0.0
    %112 = vmatpush.msra.mxu0 0.0
    %113 = vmatpush.msra.mxu0 0.0
    %114 = vmatpush.msra.mxu0 0.0
    %115 = vmatpush.msra.mxu0 0.0
    %116 = vmatpush.msra.mxu0 0.0
    %117 = vmatpush.msra.mxu0 0.0
    %118 = vmatpush.msra.mxu0 0.0
    %119 = vmatpush.msra.mxu0 0.0
    %120 = vmatpush.msra.mxu0 0.0
    %121 = vmatpush.msra.mxu0 0.0
    %122 = vmatpush.msra.mxu0 0.0
    %123 = vmatpush.msra.mxu0 0.0
    %124 = vmatpush.msra.mxu0 %v108
    %125 = vmatpush.msra.mxu0 %v13
    %126 = vmatmul.f32.gmra.mxu0 %v105
    %v127 = vpop.f32.mrf.mxu0
    %v128 = vadd.f32 0.0, %v127
    %129 = vdwg.mxu0
    %v130 = vadd.f32 %v80, %v128
    %v131 = vtanh.pop %v130
    %v133 = vsel %vm103, %v131, 0
    %135 = vmatpush.msra.mxu0 0.0
    %136 = vmatpush.msra.mxu0 0.0
    %137 = vmatpush.msra.mxu0 0.0
    %138 = vmatpush.msra.mxu0 0.0
    %139 = vmatpush.msra.mxu0 0.0
    %140 = vmatpush.msra.mxu0 0.0
    %141 = vmatpush.msra.mxu0 0.0
    %142 = vmatpush.msra.mxu0 0.0
    %143 = vmatpush.msra.mxu0 0.0
    %144 = vmatpush.msra.mxu0 0.0
    %145 = vmatpush.msra.mxu0 0.0
    %146 = vmatpush.msra.mxu0 0.0
    %147 = vmatpush.msra.mxu0 0.0
    %148 = vmatpush.msra.mxu0 0.0
    %149 = vmatpush.msra.mxu0 %v108
    %150 = vmatpush.msra.mxu0 %v13
    %151 = vmatmul.f32.gmra.mxu0 %v133
    %v152 = vpop.f32.mrf.mxu0
    %v153 = vadd.f32 0.0, %v152
    %154 = vdwg.mxu0
    %v155 = vadd.f32 %v83, %v153
    %v156 = vtanh.pop %v155
    %v158 = vsel %vm103, %v156, 0
    %160 = vmatpush.msra.mxu0 0.0
    %161 = vmatpush.msra.mxu0 0.0
    %162 = vmatpush.msra.mxu0 0.0
    %163 = vmatpush.msra.mxu0 0.0
    %164 = vmatpush.msra.mxu0 0.0
    %165 = vmatpush.msra.mxu0 0.0
    %166 = vmatpush.msra.mxu0 0.0
    %167 = vmatpush.msra.mxu0 0.0
    %168 = vmatpush.msra.mxu0 0.0
    %169 = vmatpush.msra.mxu0 0.0
    %170 = vmatpush.msra.mxu0 0.0
    %171 = vmatpush.msra.mxu0 0.0
    %172 = vmatpush.msra.mxu0 0.0
    %173 = vmatpush.msra.mxu0 0.0
    %174 = vmatpush.msra.mxu0 %v108
    %175 = vmatpush.msra.mxu0 %v13
    %176 = vmatmul.f32.gmra.mxu0 %v158
    %v177 = vpop.f32.mrf.mxu0
    %v178 = vadd.f32 0.0, %v177
    %179 = vdwg.mxu0
    %v180 = vadd.f32 %v86, %v178
    %v181 = vtanh.pop %v180
    %v183 = vsel %vm103, %v181, 0
    %185 = vmatpush.msra.mxu0 0.0
    %186 = vmatpush.msra.mxu0 0.0
    %187 = vmatpush.msra.mxu0 0.0
    %188 = vmatpush.msra.mxu0 0.0
    %189 = vmatpush.msra.mxu0 0.0
    %190 = vmatpush.msra.mxu0 0.0
    %191 = vmatpush.msra.mxu0 0.0
    %192 = vmatpush.msra.mxu0 0.0
    %193 = vmatpush.msra.mxu0 0.0
    %194 = vmatpush.msra.mxu0 0.0
    %195 = vmatpush.msra.mxu0 0.0
    %196 = vmatpush.msra.mxu0 0.0
    %197 = vmatpush.msra.mxu0 0.0
    %198 = vmatpush.msra.mxu0 0.0
    %199 = vmatpush.msra.mxu0 %v108
    %200 = vmatpush.msra.mxu0 %v13
    %201 = vmatmul.f32.gmra.mxu0 %v183
    %v202 = vpop.f32.mrf.mxu0
    %v203 = vadd.f32 0.0, %v202
    %204 = vdwg.mxu0
    %v205 = vadd.f32 %v89, %v203
    %v206 = vtanh.pop %v205
    %v208 = vsel %vm103, %v206, 0
    %210 = vmatpush.msra.mxu0 0.0
    %211 = vmatpush.msra.mxu0 0.0
    %212 = vmatpush.msra.mxu0 0.0
    %213 = vmatpush.msra.mxu0 0.0
    %214 = vmatpush.msra.mxu0 0.0
    %215 = vmatpush.msra.mxu0 0.0
    %216 = vmatpush.msra.mxu0 0.0
    %217 = vmatpush.msra.mxu0 0.0
    %218 = vmatpush.msra.mxu0 0.0
    %219 = vmatpush.msra.mxu0 0.0
    %220 = vmatpush.msra.mxu0 0.0
    %221 = vmatpush.msra.mxu0 0.0
    %222 = vmatpush.msra.mxu0 0.0
    %223 = vmatpush.msra.mxu0 0.0
    %224 = vmatpush.msra.mxu0 %v108
    %225 = vmatpush.msra.mxu0 %v13
    %226 = vmatmul.f32.gmra.mxu0 %v208
    %v227 = vpop.f32.mrf.mxu0
    %v228 = vadd.f32 0.0, %v227
    %229 = vdwg.mxu0
    %v230 = vadd.f32 %v92, %v228
    %v231 = vtanh.pop %v230
    %v233 = vsel %vm103, %v231, 0
    %235 = vmatpush.msra.mxu0 0.0
    %236 = vmatpush.msra.mxu0 0.0
    %237 = vmatpush.msra.mxu0 0.0
    %238 = vmatpush.msra.mxu0 0.0
    %239 = vmatpush.msra.mxu0 0.0
    %240 = vmatpush.msra.mxu0 0.0
    %241 = vmatpush.msra.mxu0 0.0
    %242 = vmatpush.msra.mxu0 0.0
    %243 = vmatpush.msra.mxu0 0.0
    %244 = vmatpush.msra.mxu0 0.0
    %245 = vmatpush.msra.mxu0 0.0
    %246 = vmatpush.msra.mxu0 0.0
    %247 = vmatpush.msra.mxu0 0.0
    %248 = vmatpush.msra.mxu0 0.0
    %249 = vmatpush.msra.mxu0 %v108
    %250 = vmatpush.msra.mxu0 %v13
    %251 = vmatmul.f32.gmra.mxu0 %v233
    %v252 = vpop.f32.mrf.mxu0
    %v253 = vadd.f32 0.0, %v252
    %254 = vdwg.mxu0
    %v255 = vadd.f32 %v95, %v253
    %v256 = vtanh.pop %v255
    %v258 = vsel %vm103, %v256, 0
    %260 = vmatpush.msra.mxu0 0.0
    %261 = vmatpush.msra.mxu0 0.0
    %262 = vmatpush.msra.mxu0 0.0
    %263 = vmatpush.msra.mxu0 0.0
    %264 = vmatpush.msra.mxu0 0.0
    %265 = vmatpush.msra.mxu0 0.0
    %266 = vmatpush.msra.mxu0 0.0
    %267 = vmatpush.msra.mxu0 0.0
    %268 = vmatpush.msra.mxu0 0.0
    %269 = vmatpush.msra.mxu0 0.0
    %270 = vmatpush.msra.mxu0 0.0
    %271 = vmatpush.msra.mxu0 0.0
    %272 = vmatpush.msra.mxu0 0.0
    %273 = vmatpush.msra.mxu0 0.0
    %274 = vmatpush.msra.mxu0 %v108
    %275 = vmatpush.msra.mxu0 %v13
    %276 = vmatmul.f32.gmra.mxu0 %v258
    %v277 = vpop.f32.mrf.mxu0
    %v278 = vadd.f32 0.0, %v277
    %279 = vdwg.mxu0
    %v280 = vadd.f32 %v98, %v278
    %v281 = vtanh.pop %v280
    %v283 = vsel %vm103, %v281, 0
    %285 = vmatpush.msra.mxu0 0.0
    %286 = vmatpush.msra.mxu0 0.0
    %287 = vmatpush.msra.mxu0 0.0
    %288 = vmatpush.msra.mxu0 0.0
    %289 = vmatpush.msra.mxu0 0.0
    %290 = vmatpush.msra.mxu0 0.0
    %291 = vmatpush.msra.mxu0 0.0
    %292 = vmatpush.msra.mxu0 0.0
    %293 = vmatpush.msra.mxu0 0.0
    %294 = vmatpush.msra.mxu0 0.0
    %295 = vmatpush.msra.mxu0 0.0
    %296 = vmatpush.msra.mxu0 0.0
    %297 = vmatpush.msra.mxu0 0.0
    %298 = vmatpush.msra.mxu0 0.0
    %299 = vmatpush.msra.mxu0 %v108
    %300 = vmatpush.msra.mxu0 %v13
    %301 = vmatmul.f32.gmra.mxu0 %v283
    %v302 = vpop.f32.mrf.mxu0
    %v303 = vadd.f32 0.0, %v302
    %304 = vdwg.mxu0
    %v305 = vadd.f32 %v101, %v303
    %v306 = vtanh.pop %v305
    %v307 = vperm.slane %v20, 0
    %v309 = vsel %vm103, %v306, 0
    %v312 = vsel %vm58, %v17, 0
    %314 = vmatpush.msra.mxu0 0.0
    %315 = vmatpush.msra.mxu0 0.0
    %316 = vmatpush.msra.mxu0 0.0
    %317 = vmatpush.msra.mxu0 0.0
    %318 = vmatpush.msra.mxu0 0.0
    %319 = vmatpush.msra.mxu0 0.0
    %320 = vmatpush.msra.mxu0 0.0
    %321 = vmatpush.msra.mxu0 0.0
    %322 = vmatpush.msra.mxu0 0.0
    %323 = vmatpush.msra.mxu0 0.0
    %324 = vmatpush.msra.mxu0 0.0
    %325 = vmatpush.msra.mxu0 0.0
    %326 = vmatpush.msra.mxu0 0.0
    %327 = vmatpush.msra.mxu0 0.0
    %328 = vmatpush.msra.mxu0 %v312
    %329 = vmatpush.msra.mxu0 %v16
    %330 = vmatmul.f32.gmra.mxu0 %v133
    %v331 = vpop.f32.mrf.mxu0
    %v332 = vadd.f32 %v307, %v331
    %333 = vmatmul.f32.gmra.mxu0 %v158
    %v334 = vpop.f32.mrf.mxu0
    %v335 = vadd.f32 %v307, %v334
    %336 = vmatmul.f32.gmra.mxu0 %v183
    %v337 = vpop.f32.mrf.mxu0
    %v338 = vadd.f32 %v307, %v337
    %339 = vmatmul.f32.gmra.mxu0 %v208
    %v340 = vpop.f32.mrf.mxu0
    %v341 = vadd.f32 %v307, %v340
    %342 = vmatmul.f32.gmra.mxu0 %v233
    %v343 = vpop.f32.mrf.mxu0
    %v344 = vadd.f32 %v307, %v343
    %345 = vmatmul.f32.gmra.mxu0 %v258
    %v346 = vpop.f32.mrf.mxu0
    %v347 = vadd.f32 %v307, %v346
    %348 = vmatmul.f32.gmra.mxu0 %v283
    %v349 = vpop.f32.mrf.mxu0
    %v350 = vadd.f32 %v307, %v349
    %351 = vmatmul.f32.gmra.mxu0 %v309
    %v352 = vpop.f32.mrf.mxu0
    %v353 = vadd.f32 %v307, %v352
    %354 = vdwg.mxu0
    %355 = vst.msk [vmem:[#allocation2] sm:$0xff] %vm103, %v332
    %356 = vst.msk [vmem:[#allocation2 + $0x8] sm:$0xff] %vm103, %v335
    %357 = vst.msk [vmem:[#allocation2 + $0x10] sm:$0xff] %vm103, %v338
    %358 = vst.msk [vmem:[#allocation2 + $0x18] sm:$0xff] %vm103, %v341
    %359 = vst.msk [vmem:[#allocation2 + $0x20] sm:$0xff] %vm103, %v344
    %360 = vst.msk [vmem:[#allocation2 + $0x28] sm:$0xff] %vm103, %v347
    %361 = vst.msk [vmem:[#allocation2 + $0x30] sm:$0xff] %vm103, %v350
    %362 = vst.msk [vmem:[#allocation2 + $0x38] sm:$0xff] %vm103, %v353
    %v363 = vld [vmem:[#allocation2] ss:$8 sm:$0xf]
    %v364 = vld [vmem:[#allocation2] ss:$8 sm:$0xf0]
    %v365 = vor.u32 %v363, %v364
    %v367 = vsel %vm58, %v19, 0
    %369 = vmatpush.msra.mxu0 0.0
    %370 = vmatpush.msra.mxu0 0.0
    %371 = vmatpush.msra.mxu0 0.0
    %372 = vmatpush.msra.mxu0 0.0
    %373 = vmatpush.msra.mxu0 0.0
    %374 = vmatpush.msra.mxu0 0.0
    %375 = vmatpush.msra.mxu0 0.0
    %376 = vmatpush.msra.mxu0 0.0
    %377 = vmatpush.msra.mxu0 0.0
    %378 = vmatpush.msra.mxu0 0.0
    %379 = vmatpush.msra.mxu0 0.0
    %380 = vmatpush.msra.mxu0 0.0
    %381 = vmatpush.msra.mxu0 0.0
    %382 = vmatpush.msra.mxu0 0.0
    %383 = vmatpush.msra.mxu0 %v367
    %384 = vmatpush.msra.mxu0 %v18
    %385 = vmatmul.f32.gmra.mxu0 %v105
    %v386 = vpop.f32.mrf.mxu0
    %v387 = vadd.f32 0.0, %v386
    %388 = vdwg.mxu0
    %v389 = vadd.f32 %v365, %v387
    %v390 = vtanh.pop %v389
    %s391 = scalar_lea.vmem [#allocation2], 1
    %v392 = vld [vmem:[%s391] ss:$8 sm:$0xf]
    %v393 = vld [vmem:[%s391] ss:$8 sm:$0xf0]
    %v394 = vor.u32 %v392, %v393
    %v396 = vsel %vm103, %v390, 0
    %398 = vmatpush.msra.mxu0 0.0
    %399 = vmatpush.msra.mxu0 0.0
    %400 = vmatpush.msra.mxu0 0.0
    %401 = vmatpush.msra.mxu0 0.0
    %402 = vmatpush.msra.mxu0 0.0
    %403 = vmatpush.msra.mxu0 0.0
    %404 = vmatpush.msra.mxu0 0.0
    %405 = vmatpush.msra.mxu0 0.0
    %406 = vmatpush.msra.mxu0 0.0
    %407 = vmatpush.msra.mxu0 0.0
    %408 = vmatpush.msra.mxu0 0.0
    %409 = vmatpush.msra.mxu0 0.0
    %410 = vmatpush.msra.mxu0 0.0
    %411 = vmatpush.msra.mxu0 0.0
    %412 = vmatpush.msra.mxu0 %v367
    %413 = vmatpush.msra.mxu0 %v18
    %414 = vmatmul.f32.gmra.mxu0 %v396
    %v415 = vpop.f32.mrf.mxu0
    %v416 = vadd.f32 0.0, %v415
    %417 = vdwg.mxu0
    %v418 = vadd.f32 %v394, %v416
    %v419 = vtanh.pop %v418
    %v420 = vrot.slane %v390, 7
    %v423 = vrot.slane %v419, 6
    %vm425 = vcmask 1040384
    %v426 = vsel %vm425, %v420, %v423
    %v427 = vperm.slane %v23, 0
    %v429 = vsel %vm103, %v426, 0
    %v432 = vsel %vm58, %v22, 0
    %434 = vmatpush.msra.mxu0 0.0
    %435 = vmatpush.msra.mxu0 0.0
    %436 = vmatpush.msra.mxu0 0.0
    %437 = vmatpush.msra.mxu0 0.0
    %438 = vmatpush.msra.mxu0 0.0
    %439 = vmatpush.msra.mxu0 0.0
    %440 = vmatpush.msra.mxu0 0.0
    %441 = vmatpush.msra.mxu0 0.0
    %442 = vmatpush.msra.mxu0 0.0
    %443 = vmatpush.msra.mxu0 0.0
    %444 = vmatpush.msra.mxu0 0.0
    %445 = vmatpush.msra.mxu0 0.0
    %446 = vmatpush.msra.mxu0 0.0
    %447 = vmatpush.msra.mxu0 0.0
    %448 = vmatpush.msra.mxu0 %v432
    %449 = vmatpush.msra.mxu0 %v21
    %450 = vmatmul.f32.gmra.mxu0 %v429
    %v451 = vpop.f32.mrf.mxu0
    %v452 = vadd.f32 %v427, %v451
    %453 = vdwg.mxu0
    %vm454 = vcmask 25600
    %455 = vst.msk [vmem:[#allocation3] sm:$0x3] %vm454, %v452
    // Predicated region
    $region10: #{tpu_custom_call.1} parent=1 // pred_check
      _
    $region11: #{tpu_custom_call.1} parent=1 // pred_check_branch
      %457 = sbr.rel (0) target = $region13
    $region12: #{tpu_custom_call.1} parent=1 // pred_region
      %459 = vsyncadd [#allocation4], 0
      %s461 = sshll.u32 [#allocation3], 4
      %s462 = int_to_ptr.vmem [resolvable:$true] %s461
      %s463 = sshll.u32 %s2, 4
      %s464 = int_to_ptr.hbm [resolvable:$true] %s463
      %466 = dma.vmem_to_hbm [thread:$0]  %s462, 32, %s464, [#allocation4]
    $region13: #{tpu_custom_call.1} parent=1 // pred_fallthru
      _
    // Predicated region
    $region14: #{tpu_custom_call.1} parent=1 // pred_check
      _
    $region15: #{tpu_custom_call.1} parent=1 // pred_check_branch
      %468 = sbr.rel (0) target = $region17
    $region16: #{tpu_custom_call.1} parent=1 // pred_region
      %470 = dma.done [#allocation4], 32
    $region17: #{tpu_custom_call.1} parent=1 // pred_fallthru
      _
    %471 = vsyncpa [#allocation4], 1

</llo_original>
